<compile_context>
chip_gen: v5e
topology: v5e:2x2
jax: 0.10.0
libtpu: 0.0.40
codegen_flags: <defaults>
</compile_context>

<pallas_src>
import functools

import jax
import jax.numpy as jnp
from jax.experimental import pallas as pl
from jax.experimental.pallas import tpu as pltpu


def _round_up(x: int, m: int) -> int:
    return ((x + m - 1) // m) * m


def _cdiv(a: int, b: int) -> int:
    return -(-a // b)


def _sublane(itemsize: int) -> int:
    # f32 -> 8 rows, bf16 -> 16, int8/fp8 -> 32 (sub-32-bit packs along sublanes).
    return max(8, 32 // max(itemsize, 1))


def _tpu_generation() -> str:
    try:
        kind = jax.devices()[0].device_kind.lower()
    except Exception:
        return "unknown"
    if "v5" in kind:
        return "v5"
    if "v6" in kind:
        return "v6"
    if "7" in kind:
        return "v7"
    return "unknown"


# generation -> (target bytes per input tile, pipeline buffers per input,
#                vmem_limit_bytes). v7x has only 64 MiB VMEM per TC, v5e/v6e 128.
_GEN_CONFIG = {
    "v5":      (int(1.5 * (1 << 20)), 2, 32 * 1024 * 1024),
    "v6":      (4 << 20,              2, 64 * 1024 * 1024),
    "v7":      (2 << 20,              3, 48 * 1024 * 1024),
    "unknown": (int(1.5 * (1 << 20)), 2, 32 * 1024 * 1024),
}


def _pick_block_rows(batch_fold: int, dim_fold: int, itemsize: int,
                     target_tile_bytes: int, sub: int) -> int:
    """Rows per tile: bytes-based (not a fixed row cap), rounded to the dtype's
    sublane packing, and capped so the grid keeps >=2 (ideally >=4) blocks when
    the batch is big enough, so v7x's two TensorCores both get work."""
    b_ceil = _round_up(max(batch_fold, 1), sub)
    tb = target_tile_bytes // max(dim_fold * itemsize, 1)
    tb = max(sub, tb - tb % sub)
    tb = min(tb, b_ceil)
    if b_ceil >= 4 * sub:
        tb = min(tb, _round_up(_cdiv(b_ceil, 4), sub))   # aim for >= 4 blocks
    elif b_ceil >= 2 * sub:
        tb = min(tb, _round_up(_cdiv(b_ceil, 2), sub))   # at least 2 blocks
    return max(tb, sub)


def _emb_spec(tb: int, dim_fold: int, nbuf: int) -> pl.BlockSpec:
    if nbuf != 2:
        try:
            return pl.BlockSpec((tb, dim_fold), lambda i: (i, 0),
                                pipeline_mode=pl.Buffered(nbuf))
        except Exception:  # older jax without pipeline_mode / Buffered
            pass
    return pl.BlockSpec((tb, dim_fold), lambda i: (i, 0))


def _make_triplet_kernel(batch: int, block_rows: int, fold: int, dim: int,
                         need_mask: bool):
    """Per grid step: partial sum of relu(||a-p||^2 - ||a-n||^2 + margin) over
    the rows of this tile.  Embeddings arrive pre-folded ((B, D) ->
    (B/fold, fold*D)) so narrow-D inputs stay lane-dense; padded rows (zero
    padding / ragged tail) are masked out, and the mask only runs on the last
    grid step."""

    def kernel(margin_ref, a_ref, p_ref, n_ref, out_ref):
        i = pl.program_id(0)

        a = a_ref[...].astype(jnp.float32)
        p = p_ref[...].astype(jnp.float32)
        n = n_ref[...].astype(jnp.float32)

        # (a-p)^2 - (a-n)^2 == (n - p) * (2a - p - n): one fused pass over data.
        q = (n - p) * (2.0 * a - p - n)                 # (TB, fold*dim), f32
        m = margin_ref[0]

        # Exact per-original-row sums via static lane slices (fold is a small
        # trace-time constant; no MXU / bf16-pass rounding involved).
        seg_losses = []
        for c in range(fold):
            seg = jnp.sum(q[:, c * dim:(c + 1) * dim], axis=1, keepdims=True)
            seg_losses.append(jnp.maximum(seg + m, 0.0))     # F.relu

        def write_partial(masked: bool):
            acc = jnp.zeros((block_rows, 1), jnp.float32)
            if masked:
                rows = i * block_rows + jax.lax.broadcasted_iota(
                    jnp.int32, (block_rows, 1), 0)
            for c, loss in enumerate(seg_losses):
                if masked:
                    loss = jnp.where(rows * fold + c < batch, loss, 0.0)
                acc = acc + loss
            out_ref[...] = jnp.sum(acc, axis=0, keepdims=True)   # (1, 1)

        if need_mask:
            last = pl.num_programs(0) - 1

            @pl.when(i == last)
            def _():
                write_partial(True)

            @pl.when(i != last)
            def _():
                write_partial(False)
        else:
            write_partial(False)

    return kernel


@functools.partial(jax.jit, static_argnames=("size_average", "block_rows"))
def triplet_loss(anchor, positive, negative, margin,
                 size_average: bool = True, block_rows: int | None = None):
    """Pallas equivalent of TripletLoss(margin)(anchor, positive, negative)."""
    assert anchor.shape == positive.shape == negative.shape
    assert anchor.ndim == 2, "expected (batch, embedding_dim)"
    B, D = anchor.shape
    itemsize = jnp.dtype(anchor.dtype).itemsize
    sub = _sublane(itemsize)

    tile_bytes, nbuf, vmem_limit = _GEN_CONFIG[_tpu_generation()]

    # Lane folding: pack `fold` consecutive rows along the lane axis when D is
    # narrow so VMEM tiles / vregs / DMA beats are lane-dense.
    # TODO(synk): the embedding (lane) axis itself is never tiled; huge D would
    # need a second grid axis, not required for these shapes.
    fold = max(1, 128 // D) if D < 128 else 1
    d_fold = fold * D
    b_fold_raw = _cdiv(B, fold)

    if block_rows is not None:
        tb = max(sub, _round_up(block_rows, sub))
    else:
        tb = _pick_block_rows(b_fold_raw, d_fold, itemsize, tile_bytes, sub)

    num_blocks = _cdiv(b_fold_raw, tb)
    b_fold = num_blocks * tb           # folded rows streamed through the grid
    b_pad = b_fold * fold              # original rows after zero padding
    need_mask = b_pad != B

    def fold_rows(x):
        if b_pad != B:
            x = jnp.pad(x, ((0, b_pad - B), (0, 0)))
        return x.reshape(b_fold, d_fold)

    a_f, p_f, n_f = fold_rows(anchor), fold_rows(positive), fold_rows(negative)
    margin_arr = jnp.asarray(margin, dtype=jnp.float32).reshape((1,))

    kernel = _make_triplet_kernel(B, tb, fold, D, need_mask)
    emb_spec = _emb_spec(tb, d_fold, nbuf)

    cost = pl.CostEstimate(
        flops=5 * b_pad * D,
        transcendentals=0,
        bytes_accessed=3 * b_pad * D * itemsize + 4 * num_blocks,
    )

    partials = pl.pallas_call(
        kernel,
        out_shape=jax.ShapeDtypeStruct((num_blocks, 1), jnp.float32),
        grid=(num_blocks,),
        in_specs=[
            pl.BlockSpec(memory_space=pltpu.MemorySpace.SMEM),  # margin scalar
            emb_spec,   # anchor
            emb_spec,   # positive
            emb_spec,   # negative
        ],
        out_specs=pl.BlockSpec((1, 1), lambda i: (i, 0)),
        compiler_params=pltpu.CompilerParams(
            dimension_semantics=("parallel",),
            vmem_limit_bytes=vmem_limit,
        ),
        cost_estimate=cost,
    )(margin_arr, a_f, p_f, n_f)

    total = jnp.sum(partials)
    return total / B if size_average else total


def _reference(anchor, positive, negative, margin, size_average=True):
    dp = jnp.sum((anchor - positive) ** 2, axis=1)
    dn = jnp.sum((anchor - negative) ** 2, axis=1)
    losses = jnp.maximum(dp - dn + margin, 0.0)
    return jnp.mean(losses) if size_average else jnp.sum(losses)


if __name__ == "__main__":
    margin = 1.0
    key = jax.random.PRNGKey(0)

    # --- test 1: small shapes (batch=8, dim=32) -> lane folding (k=4) --------
    B, D = 8, 32
    ka, kp, kn = jax.random.split(key, 3)
    anchor = jax.random.normal(ka, (B, D), dtype=jnp.float32)
    positive = jax.random.normal(kp, (B, D), dtype=jnp.float32)
    negative = jax.random.normal(kn, (B, D), dtype=jnp.float32)

    loss = jax.block_until_ready(
        triplet_loss(anchor, positive, negative, margin, size_average=True))
    ref = _reference(anchor, positive, negative, margin, size_average=True)
    assert jnp.allclose(loss, ref, rtol=2e-5, atol=2e-5), (loss, ref)

    loss_sum = jax.block_until_ready(
        triplet_loss(anchor, positive, negative, margin, size_average=False))
    ref_sum = _reference(anchor, positive, negative, margin, size_average=False)
    assert jnp.allclose(loss_sum, ref_sum, rtol=2e-5, atol=2e-5), (loss_sum, ref_sum)

    # --- test 2: multi-block grid with ragged tail (B=20, D=256, TB=8) -------
    B2, D2 = 20, 256
    kb = jax.random.split(key, 4)
    a2 = jax.random.normal(kb[1], (B2, D2), dtype=jnp.float32)
    p2 = jax.random.normal(kb[2], (B2, D2), dtype=jnp.float32)
    n2 = jax.random.normal(kb[3], (B2, D2), dtype=jnp.float32)

    loss2 = jax.block_until_ready(
        triplet_loss(a2, p2, n2, margin, size_average=True, block_rows=8))
    ref2 = _reference(a2, p2, n2, margin, size_average=True)
    assert jnp.allclose(loss2, ref2, rtol=2e-5, atol=2e-5), (loss2, ref2)

    # --- test 3: bf16 inputs (16-row sublane packing, fold=2) ----------------
    B3, D3 = 12, 64
    kc = jax.random.split(key, 7)
    a3 = jax.random.normal(kc[4], (B3, D3), dtype=jnp.bfloat16)
    p3 = jax.random.normal(kc[5], (B3, D3), dtype=jnp.bfloat16)
    n3 = jax.random.normal(kc[6], (B3, D3), dtype=jnp.bfloat16)

    loss3 = jax.block_until_ready(
        triplet_loss(a3, p3, n3, margin, size_average=True))
    ref3 = _reference(a3.astype(jnp.float32), p3.astype(jnp.float32),
                      n3.astype(jnp.float32), margin, size_average=True)
    assert jnp.allclose(loss3, ref3, rtol=2e-5, atol=2e-5), (loss3, ref3)

    print("KERNEL_OK")
</pallas_src>

<mosaic_0001>
module attributes {stable_mosaic.version = 11 : i64} {
  func.func @kernel(%arg0: i32, %arg1: memref<1xf32, #tpu.memory_space<smem>>, %arg2: memref<8x128xf32, #tpu.memory_space<vmem>>, %arg3: memref<8x128xf32, #tpu.memory_space<vmem>>, %arg4: memref<8x128xf32, #tpu.memory_space<vmem>>, %arg5: memref<1x1xf32, #tpu.memory_space<vmem>>) attributes {dimension_semantics = [#tpu.dimension_semantics<parallel>], iteration_bounds = array<i64: 1>, scalar_prefetch = 0 : i64, scratch_operands = 0 : i64, tpu.core_type = #tpu.core_type<tc>, window_params = [{transform_indices = @transform_0, window_bounds = array<i64: 1>}, {transform_indices = @transform_1, window_bounds = array<i64: 8, 128>}, {transform_indices = @transform_2, window_bounds = array<i64: 8, 128>}, {transform_indices = @transform_3, window_bounds = array<i64: 8, 128>}, {transform_indices = @transform_4, window_bounds = array<i64: 1, 1>}]} {
    %c0 = arith.constant 0 : index
    %c0_0 = arith.constant 0 : index
    %0 = vector.load %arg2[%c0, %c0_0] : memref<8x128xf32, #tpu.memory_space<vmem>>, vector<8x128xf32>
    %c0_1 = arith.constant 0 : index
    %c0_2 = arith.constant 0 : index
    %1 = vector.load %arg3[%c0_1, %c0_2] : memref<8x128xf32, #tpu.memory_space<vmem>>, vector<8x128xf32>
    %c0_3 = arith.constant 0 : index
    %c0_4 = arith.constant 0 : index
    %2 = vector.load %arg4[%c0_3, %c0_4] : memref<8x128xf32, #tpu.memory_space<vmem>>, vector<8x128xf32>
    %3 = arith.subf %2, %1 : vector<8x128xf32>
    %cst = arith.constant 2.000000e+00 : f32
    %4 = vector.broadcast %cst : f32 to vector<8x128xf32>
    %5 = arith.mulf %4, %0 : vector<8x128xf32>
    %6 = arith.subf %5, %1 : vector<8x128xf32>
    %7 = arith.subf %6, %2 : vector<8x128xf32>
    %8 = arith.mulf %3, %7 : vector<8x128xf32>
    %c0_5 = arith.constant 0 : index
    %9 = memref.load %arg1[%c0_5] : memref<1xf32, #tpu.memory_space<smem>>
    %10 = vector.extract_strided_slice %8 {offsets = [0, 0], sizes = [8, 32], strides = [1, 1]} : vector<8x128xf32> to vector<8x32xf32>
    %cst_6 = arith.constant dense<0.000000e+00> : vector<8xf32>
    %11 = vector.multi_reduction <add>, %10, %cst_6 [1] : vector<8x32xf32> to vector<8xf32>
    %12 = vector.shape_cast %11 : vector<8xf32> to vector<8x1xf32>
    %13 = vector.broadcast %9 : f32 to vector<8x1xf32>
    %14 = arith.addf %12, %13 : vector<8x1xf32>
    %cst_7 = arith.constant 0.000000e+00 : f32
    %15 = vector.broadcast %cst_7 : f32 to vector<8x1xf32>
    %16 = arith.maximumf %14, %15 : vector<8x1xf32>
    %17 = vector.extract_strided_slice %8 {offsets = [0, 32], sizes = [8, 32], strides = [1, 1]} : vector<8x128xf32> to vector<8x32xf32>
    %cst_8 = arith.constant dense<0.000000e+00> : vector<8xf32>
    %18 = vector.multi_reduction <add>, %17, %cst_8 [1] : vector<8x32xf32> to vector<8xf32>
    %19 = vector.shape_cast %18 : vector<8xf32> to vector<8x1xf32>
    %20 = vector.broadcast %9 : f32 to vector<8x1xf32>
    %21 = arith.addf %19, %20 : vector<8x1xf32>
    %cst_9 = arith.constant 0.000000e+00 : f32
    %22 = vector.broadcast %cst_9 : f32 to vector<8x1xf32>
    %23 = arith.maximumf %21, %22 : vector<8x1xf32>
    %24 = vector.extract_strided_slice %8 {offsets = [0, 64], sizes = [8, 32], strides = [1, 1]} : vector<8x128xf32> to vector<8x32xf32>
    %cst_10 = arith.constant dense<0.000000e+00> : vector<8xf32>
    %25 = vector.multi_reduction <add>, %24, %cst_10 [1] : vector<8x32xf32> to vector<8xf32>
    %26 = vector.shape_cast %25 : vector<8xf32> to vector<8x1xf32>
    %27 = vector.broadcast %9 : f32 to vector<8x1xf32>
    %28 = arith.addf %26, %27 : vector<8x1xf32>
    %cst_11 = arith.constant 0.000000e+00 : f32
    %29 = vector.broadcast %cst_11 : f32 to vector<8x1xf32>
    %30 = arith.maximumf %28, %29 : vector<8x1xf32>
    %31 = vector.extract_strided_slice %8 {offsets = [0, 96], sizes = [8, 32], strides = [1, 1]} : vector<8x128xf32> to vector<8x32xf32>
    %cst_12 = arith.constant dense<0.000000e+00> : vector<8xf32>
    %32 = vector.multi_reduction <add>, %31, %cst_12 [1] : vector<8x32xf32> to vector<8xf32>
    %33 = vector.shape_cast %32 : vector<8xf32> to vector<8x1xf32>
    %34 = vector.broadcast %9 : f32 to vector<8x1xf32>
    %35 = arith.addf %33, %34 : vector<8x1xf32>
    %cst_13 = arith.constant 0.000000e+00 : f32
    %36 = vector.broadcast %cst_13 : f32 to vector<8x1xf32>
    %37 = arith.maximumf %35, %36 : vector<8x1xf32>
    %c0_i32 = arith.constant 0 : i32
    %38 = arith.cmpi eq, %arg0, %c0_i32 : i32
    %39 = arith.extui %38 : i1 to i32
    %c0_i32_14 = arith.constant 0 : i32
    %40 = arith.cmpi ne, %39, %c0_i32_14 : i32
    scf.if %40 {
      %cst_17 = arith.constant 0.000000e+00 : f32
      %44 = vector.broadcast %cst_17 : f32 to vector<8x1xf32>
      %c8_i32 = arith.constant 8 : i32
      %45 = arith.muli %arg0, %c8_i32 : i32
      %46 = tpu.iota {dimensions = array<i32: 0>} : vector<8x1xi32>
      %47 = vector.broadcast %45 : i32 to vector<8x1xi32>
      %48 = arith.addi %47, %46 : vector<8x1xi32>
      %c4_i32 = arith.constant 4 : i32
      %49 = vector.broadcast %c4_i32 : i32 to vector<8x1xi32>
      %50 = arith.muli %48, %49 : vector<8x1xi32>
      %c0_i32_18 = arith.constant 0 : i32
      %51 = vector.broadcast %c0_i32_18 : i32 to vector<8x1xi32>
      %52 = arith.addi %50, %51 : vector<8x1xi32>
      %c8_i32_19 = arith.constant 8 : i32
      %53 = vector.broadcast %c8_i32_19 : i32 to vector<8x1xi32>
      %54 = arith.cmpi slt, %52, %53 : vector<8x1xi32>
      %cst_20 = arith.constant 0.000000e+00 : f32
      %55 = vector.broadcast %cst_20 : f32 to vector<8x1xf32>
      %56 = arith.select %54, %16, %55 : vector<8x1xi1>, vector<8x1xf32>
      %57 = arith.addf %44, %56 : vector<8x1xf32>
      %c4_i32_21 = arith.constant 4 : i32
      %58 = vector.broadcast %c4_i32_21 : i32 to vector<8x1xi32>
      %59 = arith.muli %48, %58 : vector<8x1xi32>
      %c1_i32 = arith.constant 1 : i32
      %60 = vector.broadcast %c1_i32 : i32 to vector<8x1xi32>
      %61 = arith.addi %59, %60 : vector<8x1xi32>
      %c8_i32_22 = arith.constant 8 : i32
      %62 = vector.broadcast %c8_i32_22 : i32 to vector<8x1xi32>
      %63 = arith.cmpi slt, %61, %62 : vector<8x1xi32>
      %cst_23 = arith.constant 0.000000e+00 : f32
      %64 = vector.broadcast %cst_23 : f32 to vector<8x1xf32>
      %65 = arith.select %63, %23, %64 : vector<8x1xi1>, vector<8x1xf32>
      %66 = arith.addf %57, %65 : vector<8x1xf32>
      %c4_i32_24 = arith.constant 4 : i32
      %67 = vector.broadcast %c4_i32_24 : i32 to vector<8x1xi32>
      %68 = arith.muli %48, %67 : vector<8x1xi32>
      %c2_i32 = arith.constant 2 : i32
      %69 = vector.broadcast %c2_i32 : i32 to vector<8x1xi32>
      %70 = arith.addi %68, %69 : vector<8x1xi32>
      %c8_i32_25 = arith.constant 8 : i32
      %71 = vector.broadcast %c8_i32_25 : i32 to vector<8x1xi32>
      %72 = arith.cmpi slt, %70, %71 : vector<8x1xi32>
      %cst_26 = arith.constant 0.000000e+00 : f32
      %73 = vector.broadcast %cst_26 : f32 to vector<8x1xf32>
      %74 = arith.select %72, %30, %73 : vector<8x1xi1>, vector<8x1xf32>
      %75 = arith.addf %66, %74 : vector<8x1xf32>
      %c4_i32_27 = arith.constant 4 : i32
      %76 = vector.broadcast %c4_i32_27 : i32 to vector<8x1xi32>
      %77 = arith.muli %48, %76 : vector<8x1xi32>
      %c3_i32 = arith.constant 3 : i32
      %78 = vector.broadcast %c3_i32 : i32 to vector<8x1xi32>
      %79 = arith.addi %77, %78 : vector<8x1xi32>
      %c8_i32_28 = arith.constant 8 : i32
      %80 = vector.broadcast %c8_i32_28 : i32 to vector<8x1xi32>
      %81 = arith.cmpi slt, %79, %80 : vector<8x1xi32>
      %cst_29 = arith.constant 0.000000e+00 : f32
      %82 = vector.broadcast %cst_29 : f32 to vector<8x1xf32>
      %83 = arith.select %81, %37, %82 : vector<8x1xi1>, vector<8x1xf32>
      %84 = arith.addf %75, %83 : vector<8x1xf32>
      %cst_30 = arith.constant dense<0.000000e+00> : vector<1xf32>
      %85 = vector.multi_reduction <add>, %84, %cst_30 [0] : vector<8x1xf32> to vector<1xf32>
      %86 = vector.shape_cast %85 : vector<1xf32> to vector<1x1xf32>
      %c0_31 = arith.constant 0 : index
      %c0_32 = arith.constant 0 : index
      %87 = vector.load %arg5[%c0_31, %c0_32] : memref<1x1xf32, #tpu.memory_space<vmem>>, vector<1x1xf32>
      tpu.vector_store %arg5[%c0_31, %c0_32], %86 {strides = array<i32>} : memref<1x1xf32, #tpu.memory_space<vmem>>, vector<1x1xf32>,
    } else {
    }
    %c0_i32_15 = arith.constant 0 : i32
    %41 = arith.cmpi ne, %arg0, %c0_i32_15 : i32
    %42 = arith.extui %41 : i1 to i32
    %c0_i32_16 = arith.constant 0 : i32
    %43 = arith.cmpi ne, %42, %c0_i32_16 : i32
    scf.if %43 {
      %cst_17 = arith.constant 0.000000e+00 : f32
      %44 = vector.broadcast %cst_17 : f32 to vector<8x1xf32>
      %45 = arith.addf %44, %16 : vector<8x1xf32>
      %46 = arith.addf %45, %23 : vector<8x1xf32>
      %47 = arith.addf %46, %30 : vector<8x1xf32>
      %48 = arith.addf %47, %37 : vector<8x1xf32>
      %cst_18 = arith.constant dense<0.000000e+00> : vector<1xf32>
      %49 = vector.multi_reduction <add>, %48, %cst_18 [0] : vector<8x1xf32> to vector<1xf32>
      %50 = vector.shape_cast %49 : vector<1xf32> to vector<1x1xf32>
      %c0_19 = arith.constant 0 : index
      %c0_20 = arith.constant 0 : index
      %51 = vector.load %arg5[%c0_19, %c0_20] : memref<1x1xf32, #tpu.memory_space<vmem>>, vector<1x1xf32>
      tpu.vector_store %arg5[%c0_19, %c0_20], %50 {strides = array<i32>} : memref<1x1xf32, #tpu.memory_space<vmem>>, vector<1x1xf32>,
    } else {
    }
    return
  }
  func.func @transform_0(%arg0: i32) -> i32 {
    %c0_i32 = arith.constant 0 : i32
    %c0_i32_0 = arith.constant 0 : i32
    return %c0_i32 : i32
  }
  func.func @transform_1(%arg0: i32) -> (i32, i32) {
    %c0_i32 = arith.constant 0 : i32
    %c0_i32_0 = arith.constant 0 : i32
    return %arg0, %c0_i32 : i32, i32
  }
  func.func @transform_2(%arg0: i32) -> (i32, i32) {
    %c0_i32 = arith.constant 0 : i32
    %c0_i32_0 = arith.constant 0 : i32
    return %arg0, %c0_i32 : i32, i32
  }
  func.func @transform_3(%arg0: i32) -> (i32, i32) {
    %c0_i32 = arith.constant 0 : i32
    %c0_i32_0 = arith.constant 0 : i32
    return %arg0, %c0_i32 : i32, i32
  }
  func.func @transform_4(%arg0: i32) -> (i32, i32) {
    %c0_i32 = arith.constant 0 : i32
    %c0_i32_0 = arith.constant 0 : i32
    return %arg0, %c0_i32 : i32, i32
  }
}

</mosaic_0001>

<llo_original>
// kernel: triplet_loss.1
$region0: #{triplet_loss.1}
  #allocation0 [shape = 'u32[]', space=smem, size = 0x4, offset = 0x4, fixed_abs, tag = 'smem constant byte address 0x4 - core index']
  #allocation1 [shape = 'u32[72,128]{1,0:T(1,128)}', space=vmem, size = 0x9000, scoped, tag = 'internal scratch']
  #allocation2 [shape = 'f32[1]{0:T(128)S(6)}', space=smem, size = 0x200, scoped, tag = 'scoped memory for triplet_loss.1']
  %s0 = inlined_call_operand.<no memory space> [shape: f32[1], index: 0, kind: input, shape index: {}]
  %s1 = inlined_call_operand.vmem [shape: f32[8,128], index: 1, kind: input, shape index: {}]
  %s2 = inlined_call_operand.vmem [shape: f32[8,128], index: 2, kind: input, shape index: {}]
  %s3 = inlined_call_operand.vmem [shape: f32[8,128], index: 3, kind: input, shape index: {}]
  %s4 = inlined_call_operand.hbm [shape: f32[1,1], index: 4, kind: output, shape index: {}]
  %s5 = sld [smem:[#allocation0]]
  $region34: #{triplet_loss.1} parent=0
    _
  %s7 = ssub.s32 1, %s5
  %s8 = scalar_select 0, %s7, %s5
  %9 = sst [smem:[#allocation2]] %s0
  $region1: #{triplet_loss.1} parent=0
    #allocation3 [shape = 'u8[512]{0}', space=vmem, size = 0x400, scoped, tag = 'output window, operand 0, single buffered']
    #allocation4 [shape = 's32[1]{0}', space=sflag, size = 0x4, scoped, tag = 'scoped memory for triplet_loss.1']
    %10 = vsyncpa [#allocation4], 0
    // Predicated region
    $region2: #{triplet_loss.1} parent=1 // pred_check
      _
    $region3: #{triplet_loss.1} parent=1 // pred_check_branch
      %12 = sbr.rel (0) target = $region5
    $region4: #{triplet_loss.1} parent=1 // pred_region
      _
    $region5: #{triplet_loss.1} parent=1 // pred_fallthru
      _
    // Predicated region
    $region6: #{triplet_loss.1} parent=1 // pred_check
      _
    $region7: #{triplet_loss.1} parent=1 // pred_check_branch
      %14 = sbr.rel (0) target = $region9
    $region8: #{triplet_loss.1} parent=1 // pred_region
      _
    $region9: #{triplet_loss.1} parent=1 // pred_fallthru
      _
    // Predicated region
    $region10: #{triplet_loss.1} parent=1 // pred_check
      _
    $region11: #{triplet_loss.1} parent=1 // pred_check_branch
      %16 = sbr.rel (0) target = $region13
    $region12: #{triplet_loss.1} parent=1 // pred_region
      _
    $region13: #{triplet_loss.1} parent=1 // pred_fallthru
      _
    // Predicated region
    $region14: #{triplet_loss.1} parent=1 // pred_check
      _
    $region15: #{triplet_loss.1} parent=1 // pred_check_branch
      %18 = sbr.rel (0) target = $region17
    $region16: #{triplet_loss.1} parent=1 // pred_region
      _
    $region17: #{triplet_loss.1} parent=1 // pred_fallthru
      _
    %v19 = vld [vmem:[%s1] sm:$0xff]
    %v20 = vld [vmem:[%s2] sm:$0xff]
    %v21 = vld [vmem:[%s3] sm:$0xff]
    %v22 = vsub.f32 %v21, %v20
    %v23 = vmul.f32 %v19, 2.0
    %v24 = vsub.f32 %v23, %v20
    %v25 = vsub.f32 %v24, %v21
    %v26 = vmul.f32 %v22, %v25
    %s27 = sld [smem:[#allocation2]]
    %vm28 = vcmask 261120
    %v29 = vsel %vm28, %v26, 0.0
    %30 = vadd.xlane.f32.xlu0 %v29
    %v31 = vpop.xlane.xlu0 %30
    %v32 = vstv %s27
    %v33 = vadd.f32 %v31, %v32
    %v34 = vmax.f32 %v33, 0.0
    %36 = vrot.lane.b32.xlu0 %v26, 96
    %v37 = vpop.permute.xlu0 %36
    %v39 = vsel %vm28, %v37, 0.0
    %40 = vadd.xlane.f32.xlu0 %v39
    %v41 = vpop.xlane.xlu0 %40
    %v42 = vadd.f32 %v41, %v32
    %v43 = vmax.f32 %v42, 0.0
    %44 = vrot.lane.b32.xlu0 %v26, 64
    %v45 = vpop.permute.xlu0 %44
    %v47 = vsel %vm28, %v45, 0.0
    %48 = vadd.xlane.f32.xlu0 %v47
    %v49 = vpop.xlane.xlu0 %48
    %v50 = vadd.f32 %v49, %v32
    %v51 = vmax.f32 %v50, 0.0
    %52 = vrot.lane.b32.xlu0 %v26, 32
    %v53 = vpop.permute.xlu0 %52
    %v55 = vsel %vm28, %v53, 0.0
    %56 = vadd.xlane.f32.xlu0 %v55
    %v57 = vpop.xlane.xlu0 %56
    %v58 = vadd.f32 %v57, %v32
    %v59 = vmax.f32 %v58, 0.0
    %p60 = scmp.eq.s32.totalorder 0, 0
    // Predicated region
    $region18: #{triplet_loss.1} parent=1 // pred_check
      %p61 = pneg %p60
    $region19: #{triplet_loss.1} parent=1 // pred_check_branch
      %63 = sbr.rel (%p61) target = $region21
    $region20: #{triplet_loss.1} parent=1 // pred_region
      %s64 = smul.u32 0, 8
      %v65 = vlaneseq
      %v66 = vshrl.u32 %v65, 7
      %v67 = vstv %s64
      %v68 = vadd.s32 %v67, %v66
      %v69 = vmul.u32 %v68, 4
      %vm70 = vcmp.lt.s32.totalorder %v69, 8
      %v71 = vsel %vm70, %v34, 0.0
      %v72 = vadd.f32 %v71, 0.0
      %v73 = vadd.s32 %v69, 1
      %vm74 = vcmp.lt.s32.totalorder %v73, 8
      %v75 = vsel %vm74, %v43, 0.0
      %v76 = vadd.f32 %v72, %v75
      %v77 = vadd.s32 %v69, 2
      %vm78 = vcmp.lt.s32.totalorder %v77, 8
      %v79 = vsel %vm78, %v51, 0.0
      %v80 = vadd.f32 %v76, %v79
      %v81 = vadd.s32 %v69, 3
      %vm82 = vcmp.lt.s32.totalorder %v81, 8
      %v83 = vsel %vm82, %v59, 0.0
      %v84 = vadd.f32 %v80, %v83
      %v85 = vrot.slane %v84, 4
      %v86 = vadd.f32 %v84, %v85
      %v87 = vrot.slane %v86, 2
      %v88 = vadd.f32 %v86, %v87
      %v89 = vrot.slane %v88, 1
      %v90 = vadd.f32 %v88, %v89
      %vm91 = vcmask 0
      %92 = vst.msk [vmem:[#allocation3] sm:$0x1] %vm91, %v90
    $region21: #{triplet_loss.1} parent=1 // pred_fallthru
      _
    %p93 = scmp.ne.s32.totalorder 0, 0
    // Predicated region
    $region22: #{triplet_loss.1} parent=1 // pred_check
      %p94 = pneg %p93
    $region23: #{triplet_loss.1} parent=1 // pred_check_branch
      %96 = sbr.rel (%p94) target = $region25
    $region24: #{triplet_loss.1} parent=1 // pred_region
      %v97 = vadd.f32 %v34, 0.0
      %v98 = vadd.f32 %v97, %v43
      %v99 = vadd.f32 %v98, %v51
      %v100 = vadd.f32 %v99, %v59
      %v101 = vrot.slane %v100, 4
      %v102 = vadd.f32 %v100, %v101
      %v103 = vrot.slane %v102, 2
      %v104 = vadd.f32 %v102, %v103
      %v105 = vrot.slane %v104, 1
      %v106 = vadd.f32 %v104, %v105
      %vm107 = vcmask 0
      %108 = vst.msk [vmem:[#allocation3] sm:$0x1] %vm107, %v106
    $region25: #{triplet_loss.1} parent=1 // pred_fallthru
      _
    // Predicated region
    $region26: #{triplet_loss.1} parent=1 // pred_check
      _
    $region27: #{triplet_loss.1} parent=1 // pred_check_branch
      %110 = sbr.rel (0) target = $region29
    $region28: #{triplet_loss.1} parent=1 // pred_region
      %112 = vsyncadd [#allocation4], 0
      %s114 = sshll.u32 [#allocation3], 4
      %s115 = int_to_ptr.vmem [resolvable:$true] %s114
      %s116 = sshll.u32 %s4, 4
      %s117 = int_to_ptr.hbm [resolvable:$true] %s116
      %119 = dma.vmem_to_hbm [thread:$0]  %s115, 16, %s117, [#allocation4]
    $region29: #{triplet_loss.1} parent=1 // pred_fallthru
      _
    // Predicated region
    $region30: #{triplet_loss.1} parent=1 // pred_check
      _
    $region31: #{triplet_loss.1} parent=1 // pred_check_branch
      %121 = sbr.rel (0) target = $region33
    $region32: #{triplet_loss.1} parent=1 // pred_region
      %123 = dma.done [#allocation4], 16
    $region33: #{triplet_loss.1} parent=1 // pred_fallthru
      _
    %124 = vsyncpa [#allocation4], 1

</llo_original>
